<compile_context>
chip_gen: v7x
topology: tpu7x:2x2x1
jax: 0.10.0
libtpu: 0.0.40
codegen_flags: <defaults>
</compile_context>

<pallas_src>
import functools

import jax
import jax.numpy as jnp
from jax.experimental import pallas as pl
from jax.experimental.pallas import tpu as pltpu

BN_EPS = 1e-5
_LANE = 128
_SUBLANE = 8
_DEFAULT_TILE_LANES = 2048            # output positions (lanes) per grid step
_VMEM_LIMIT_BYTES = 32 * 1024 * 1024  # safe on v5e/v6e (128 MiB) and v7x (64 MiB physical)


def _round_up(x, m):
    return (x + m - 1) // m * m


# ---------------------------------------------------------------------------
# Shared tile conv: one fused MXU matmul over the k taps, time on lanes.
# ---------------------------------------------------------------------------
def _conv_tile(x_ref, halo_ref, w_ref, *, k, stride, tl_out, use_relu):
    # x_ref   : [stride, c_in_pad, tl_out]   phase-split input window for this tile
    # halo_ref: [stride, c_in_pad, 128]      next 128 phase-lanes (covers the k-1 tap halo)
    # w_ref   : [c_out_pad8, k*c_in_pad]     fused-tap weights
    # returns : [c_out_pad8, tl_out] float32 post-activation conv output
    cats = [jnp.concatenate([x_ref[s], halo_ref[s]], axis=-1) for s in range(stride)]
    taps = []
    for j in range(k):                       # static -> unrolled; lane shifts only (XLU)
        off = j // stride
        taps.append(cats[j % stride][:, off:off + tl_out])
    x_win = jnp.concatenate(taps, axis=0)    # [k*c_in_pad, tl_out]
    acc = jnp.dot(w_ref[...], x_win, preferred_element_type=jnp.float32)
    if use_relu:
        acc = jnp.maximum(acc, 0.0)
    return acc


# ---------------------------------------------------------------------------
# Pass 1: conv + ReLU (recomputed, never stored) + per-tile centered BN partials
# ---------------------------------------------------------------------------
def _conv_stats_kernel(x_ref, halo_ref, w_ref, stats_ref, *,
                       k, stride, tl_out, use_relu, l_out):
    acc = _conv_tile(x_ref, halo_ref, w_ref, k=k, stride=stride,
                     tl_out=tl_out, use_relu=use_relu)
    i = pl.program_id(1)
    valid = jnp.minimum(tl_out, l_out - i * tl_out)            # true rows in this tile (>=1)
    lane = jax.lax.broadcasted_iota(jnp.int32, acc.shape, 1)
    mask = lane < valid                                        # exclude padded positions
    cnt = valid.astype(jnp.float32)
    s = jnp.sum(jnp.where(mask, acc, 0.0), axis=-1, keepdims=True)        # [C8, 1] tile sum
    mean_t = s / cnt
    diff = acc - mean_t
    m2 = jnp.sum(jnp.where(mask, diff * diff, 0.0), axis=-1, keepdims=True)  # centered M2
    stats_ref[...] = jnp.concatenate([s, m2], axis=-1)                    # single [C8, 2] store


# ---------------------------------------------------------------------------
# Pass 2: recompute conv + ReLU, apply folded BN scale/shift, emit NCL directly
# ---------------------------------------------------------------------------
def _conv_bn_apply_kernel(x_ref, halo_ref, w_ref, scale_ref, shift_ref, out_ref, *,
                          k, stride, tl_out, use_relu):
    acc = _conv_tile(x_ref, halo_ref, w_ref, k=k, stride=stride,
                     tl_out=tl_out, use_relu=use_relu)
    out_ref[...] = (acc * scale_ref[...] + shift_ref[...]).astype(out_ref.dtype)


def batchnorm_conv1d(x, weight, gamma, beta, *, stride, padding, use_relu=True,
                     compute_dtype=jnp.bfloat16, tile_lanes=_DEFAULT_TILE_LANES):
    """x: [N, C_in, L] (PyTorch NCL), weight: [C_out, C_in, k].  Returns [N, C_out, L_out]."""
    n, c_in, length = x.shape
    c_out, _, k = weight.shape
    assert k - 1 <= _LANE * stride, "128-lane halo must cover all taps"
    l_out = (length + 2 * padding - k) // stride + 1
    c_in_pad = _round_up(c_in, _SUBLANE)
    c_out_pad = _round_up(c_out, _SUBLANE)     # sublane pad only (time lives on lanes)

    tl_out = min(_round_up(tile_lanes, _LANE), _round_up(l_out, _LANE))
    l_tiles = pl.cdiv(l_out, tl_out)
    l_phase = l_tiles * tl_out + _LANE         # +128 so the last tile's halo block is in-bounds
    l_total = l_phase * stride
    right_pad = l_total - padding - length
    assert right_pad >= 0

    # --- phase-split, channel-padded, zero-padded input (NCL kept; no im2col, no tap dup) ---
    #     x_ph[b, s, c, t] = x_zero_padded[b, c, t*stride + s]
    # TODO(synk): for stride>1 this transpose is a real XLA HBM roundtrip of x (still far
    # cheaper than in-kernel strided lane loads); for stride==1 it is a free reshape.
    x_cp = jnp.pad(x, ((0, 0), (0, c_in_pad - c_in), (padding, right_pad)))
    x_ph = x_cp.reshape(n, c_in_pad, l_phase, stride).transpose(0, 3, 1, 2)
    x_ph = x_ph.astype(compute_dtype)                          # [n, stride, c_in_pad, l_phase]

    # --- fused-tap weights: W_f[o, j*c_in_pad + c] = weight[o, c, j] ---
    w_f = jnp.transpose(weight, (0, 2, 1))                     # [c_out, k, c_in]
    w_f = jnp.pad(w_f, ((0, c_out_pad - c_out), (0, 0), (0, c_in_pad - c_in)))
    w_f = w_f.reshape(c_out_pad, k * c_in_pad).astype(compute_dtype)

    grid = (n, l_tiles)
    halo_blocks = tl_out // _LANE
    x_main_spec = pl.BlockSpec((None, stride, c_in_pad, tl_out),
                               lambda b, i: (b, 0, 0, i))
    x_halo_spec = pl.BlockSpec((None, stride, c_in_pad, _LANE),
                               lambda b, i: (b, 0, 0, (i + 1) * halo_blocks))
    w_spec = pl.BlockSpec((c_out_pad, k * c_in_pad), lambda b, i: (0, 0))

    m_rows = n * l_tiles * tl_out
    conv_flops = 2 * m_rows * k * c_in_pad * c_out_pad
    x_bytes = x_ph.size * x_ph.dtype.itemsize
    cparams = pltpu.CompilerParams(dimension_semantics=("parallel", "parallel"),
                                   vmem_limit_bytes=_VMEM_LIMIT_BYTES)

    # ---------------- pass 1: per-tile BN partial statistics (tiny output) ----------------
    stats = pl.pallas_call(
        functools.partial(_conv_stats_kernel, k=k, stride=stride, tl_out=tl_out,
                          use_relu=use_relu, l_out=l_out),
        grid=grid,
        in_specs=[x_main_spec, x_halo_spec, w_spec],
        out_specs=pl.BlockSpec((None, None, c_out_pad, 2), lambda b, i: (b, i, 0, 0)),
        out_shape=jax.ShapeDtypeStruct((n, l_tiles, c_out_pad, 2), jnp.float32),
        compiler_params=cparams,
        cost_estimate=pl.CostEstimate(
            flops=conv_flops + 5 * m_rows * c_out_pad,
            transcendentals=0,
            bytes_accessed=x_bytes + n * l_tiles * c_out_pad * 2 * 4),
    )(x_ph, x_ph, w_f)

    # -------- tiny cross-tile Chan/Welford combine (O(tiles * C_out), done in JAX) --------
    sums = stats[..., 0]                                        # [n, l_tiles, C8]
    m2s = stats[..., 1]
    counts = jnp.minimum(tl_out, l_out - jnp.arange(l_tiles) * tl_out)
    counts = counts.astype(jnp.float32).reshape(1, l_tiles, 1)
    total = jnp.float32(n * l_out)
    mean = jnp.sum(sums, axis=(0, 1)) / total                   # [C8]
    tile_mean = sums / counts
    m2_tot = jnp.sum(m2s, axis=(0, 1)) + jnp.sum(counts * (tile_mean - mean) ** 2, axis=(0, 1))
    var = m2_tot / total                                        # biased var, as torch BN normalizes
    inv_std = jax.lax.rsqrt(var + BN_EPS)
    gamma_p = jnp.pad(gamma.astype(jnp.float32), (0, c_out_pad - c_out))
    beta_p = jnp.pad(beta.astype(jnp.float32), (0, c_out_pad - c_out))
    scale = (gamma_p * inv_std).reshape(c_out_pad, 1)
    shift = (beta_p - mean * gamma_p * inv_std).reshape(c_out_pad, 1)
    # TODO(synk): torch training-mode BN also updates running_mean / running_var buffers
    # (unbiased var); that side-state is not part of the forward output and is not produced.

    # ---------------- pass 2: recompute conv, apply scale/shift, write NCL ----------------
    out = pl.pallas_call(
        functools.partial(_conv_bn_apply_kernel, k=k, stride=stride, tl_out=tl_out,
                          use_relu=use_relu),
        grid=grid,
        in_specs=[x_main_spec, x_halo_spec, w_spec,
                  pl.BlockSpec((c_out_pad, 1), lambda b, i: (0, 0)),
                  pl.BlockSpec((c_out_pad, 1), lambda b, i: (0, 0))],
        out_specs=pl.BlockSpec((None, c_out_pad, tl_out), lambda b, i: (b, 0, i)),
        out_shape=jax.ShapeDtypeStruct((n, c_out, l_out), x.dtype),   # NCL, no wrapper transpose
        compiler_params=cparams,
        cost_estimate=pl.CostEstimate(
            flops=conv_flops + 2 * m_rows * c_out_pad,
            transcendentals=0,
            bytes_accessed=x_bytes + n * c_out * l_out * x.dtype.itemsize),
    )(x_ph, x_ph, w_f, scale, shift)
    return out


def _reference(x, weight, gamma, beta, *, stride, padding, use_relu):
    y = jax.lax.conv_general_dilated(
        x, weight, window_strides=(stride,), padding=[(padding, padding)],
        dimension_numbers=("NCH", "OIH", "NCH"))
    if use_relu:
        y = jnp.maximum(y, 0.0)
    mean = jnp.mean(y, axis=(0, 2), keepdims=True)
    var = jnp.mean((y - mean) ** 2, axis=(0, 2), keepdims=True)
    return (y - mean) * jax.lax.rsqrt(var + BN_EPS) * gamma.reshape(1, -1, 1) + beta.reshape(1, -1, 1)


if __name__ == "__main__":
    # Module config: dimentions=(C_in, C_out)=(4, 8), conv_config=(k, stride, pad)=(3, 1, 1)
    N, C_IN, L = 2, 4, 16
    C_OUT, K, STRIDE, PAD = 8, 3, 1, 1

    key = jax.random.PRNGKey(0)
    kx, kw = jax.random.split(key)
    x = jax.random.normal(kx, (N, C_IN, L), dtype=jnp.float32)

    fan_in = C_IN * K
    bound = 1.0 / (fan_in ** 0.5)
    weight = jax.random.uniform(
        kw, (C_OUT, C_IN, K), dtype=jnp.float32, minval=-bound, maxval=bound)
    gamma = jnp.ones((C_OUT,), dtype=jnp.float32)
    beta = jnp.zeros((C_OUT,), dtype=jnp.float32)

    # TODO(synk): only activation=None / ReLU are supported (matches the common usage of this
    # module); other nn.Module activations would need their own element-wise op in the kernel.
    ref = _reference(x, weight, gamma, beta, stride=STRIDE, padding=PAD, use_relu=True)

    # f32 MXU-operand path (near-exact) ...
    out_f32 = batchnorm_conv1d(x, weight, gamma, beta, stride=STRIDE, padding=PAD,
                               use_relu=True, compute_dtype=jnp.float32)
    jax.block_until_ready(out_f32)
    assert out_f32.shape == (N, C_OUT, L)
    assert float(jnp.max(jnp.abs(out_f32 - ref))) < 5e-3

    # ... and the default bf16 MXU path (looser tolerance, documented tradeoff).
    out_bf16 = batchnorm_conv1d(x, weight, gamma, beta, stride=STRIDE, padding=PAD,
                                use_relu=True)
    jax.block_until_ready(out_bf16)
    assert out_bf16.shape == (N, C_OUT, L)
    assert float(jnp.max(jnp.abs(out_bf16 - ref))) < 0.25

    print("KERNEL_OK")
</pallas_src>

<mosaic_0001>
module attributes {stable_mosaic.version = 11 : i64} {
  func.func @_conv_stats_kernel(%arg0: i32, %arg1: i32, %arg2: memref<1x1x8x128xf32, #tpu.memory_space<vmem>>, %arg3: memref<1x1x8x128xf32, #tpu.memory_space<vmem>>, %arg4: memref<8x24xf32, #tpu.memory_space<vmem>>, %arg5: memref<1x1x8x2xf32, #tpu.memory_space<vmem>>) attributes {dimension_semantics = [#tpu.dimension_semantics<parallel>, #tpu.dimension_semantics<parallel>], iteration_bounds = array<i64: 2, 1>, scalar_prefetch = 0 : i64, scratch_operands = 0 : i64, tpu.core_type = #tpu.core_type<tc>, window_params = [{transform_indices = @transform_0, window_bounds = array<i64: 1, 1, 8, 128>}, {transform_indices = @transform_1, window_bounds = array<i64: 1, 1, 8, 128>}, {pipeline_mode = #tpu.pipeline_mode<synchronous>, transform_indices = @transform_2, window_bounds = array<i64: 8, 24>}, {transform_indices = @transform_3, window_bounds = array<i64: 1, 1, 8, 2>}]} {
    %c0 = arith.constant 0 : index
    %c0_0 = arith.constant 0 : index
    %c0_1 = arith.constant 0 : index
    %c0_2 = arith.constant 0 : index
    %0 = vector.load %arg2[%c0, %c0_0, %c0_1, %c0_2] : memref<1x1x8x128xf32, #tpu.memory_space<vmem>>, vector<1x1x8x128xf32>
    %1 = vector.shape_cast %0 : vector<1x1x8x128xf32> to vector<8x128xf32>
    %c0_3 = arith.constant 0 : index
    %c0_4 = arith.constant 0 : index
    %c0_5 = arith.constant 0 : index
    %c0_6 = arith.constant 0 : index
    %2 = vector.load %arg3[%c0_3, %c0_4, %c0_5, %c0_6] : memref<1x1x8x128xf32, #tpu.memory_space<vmem>>, vector<1x1x8x128xf32>
    %3 = vector.shape_cast %2 : vector<1x1x8x128xf32> to vector<8x128xf32>
    %4 = tpu.concatenate %1, %3 in 1 : vector<8x128xf32>, vector<8x128xf32> -> vector<8x256xf32>
    %5 = vector.extract_strided_slice %4 {offsets = [0, 0], sizes = [8, 128], strides = [1, 1]} : vector<8x256xf32> to vector<8x128xf32>
    %6 = vector.extract_strided_slice %4 {offsets = [0, 1], sizes = [8, 128], strides = [1, 1]} : vector<8x256xf32> to vector<8x128xf32>
    %7 = vector.extract_strided_slice %4 {offsets = [0, 2], sizes = [8, 128], strides = [1, 1]} : vector<8x256xf32> to vector<8x128xf32>
    %8 = tpu.concatenate %5, %6, %7 in 0 : vector<8x128xf32>, vector<8x128xf32>, vector<8x128xf32> -> vector<24x128xf32>
    %c0_7 = arith.constant 0 : index
    %c0_8 = arith.constant 0 : index
    %9 = vector.load %arg4[%c0_7, %c0_8] : memref<8x24xf32, #tpu.memory_space<vmem>>, vector<8x24xf32>
    %cst = arith.constant dense<0.000000e+00> : vector<8x128xf32>
    %10 = tpu.matmul %9, %8, %cst {dimension_numbers = #tpu.dot_dimension_numbers<[1], [0], [0], [1], [0, 0, 1, 1], [], []>} : vector<8x24xf32>, vector<24x128xf32>, vector<8x128xf32> -> vector<8x128xf32>
    %cst_9 = arith.constant 0.000000e+00 : f32
    %11 = vector.broadcast %cst_9 : f32 to vector<8x128xf32>
    %12 = arith.maximumf %10, %11 : vector<8x128xf32>
    %c128_i32 = arith.constant 128 : i32
    %13 = arith.muli %arg1, %c128_i32 : i32
    %c16_i32 = arith.constant 16 : i32
    %14 = arith.subi %c16_i32, %13 : i32
    %c128_i32_10 = arith.constant 128 : i32
    %15 = arith.minsi %c128_i32_10, %14 : i32
    %16 = tpu.iota {dimensions = array<i32: 1>} : vector<8x128xi32>
    %17 = vector.broadcast %15 : i32 to vector<8x128xi32>
    %18 = arith.cmpi slt, %16, %17 : vector<8x128xi32>
    %19 = arith.sitofp %15 : i32 to f32
    %cst_11 = arith.constant 0.000000e+00 : f32
    %20 = vector.broadcast %cst_11 : f32 to vector<8x128xf32>
    %21 = arith.select %18, %12, %20 : vector<8x128xi1>, vector<8x128xf32>
    %cst_12 = arith.constant dense<0.000000e+00> : vector<8xf32>
    %22 = vector.multi_reduction <add>, %21, %cst_12 [1] : vector<8x128xf32> to vector<8xf32>
    %23 = vector.shape_cast %22 : vector<8xf32> to vector<8x1xf32>
    %24 = vector.broadcast %19 : f32 to vector<8x1xf32>
    %25 = arith.divf %23, %24 : vector<8x1xf32>
    %26 = vector.broadcast %25 : vector<8x1xf32> to vector<8x128xf32>
    %27 = arith.subf %12, %26 : vector<8x128xf32>
    %28 = arith.mulf %27, %27 : vector<8x128xf32>
    %cst_13 = arith.constant 0.000000e+00 : f32
    %29 = vector.broadcast %cst_13 : f32 to vector<8x128xf32>
    %30 = arith.select %18, %28, %29 : vector<8x128xi1>, vector<8x128xf32>
    %cst_14 = arith.constant dense<0.000000e+00> : vector<8xf32>
    %31 = vector.multi_reduction <add>, %30, %cst_14 [1] : vector<8x128xf32> to vector<8xf32>
    %32 = vector.shape_cast %31 : vector<8xf32> to vector<8x1xf32>
    %33 = tpu.concatenate %23, %32 in 1 : vector<8x1xf32>, vector<8x1xf32> -> vector<8x2xf32>
    %c0_15 = arith.constant 0 : index
    %c0_16 = arith.constant 0 : index
    %c0_17 = arith.constant 0 : index
    %c0_18 = arith.constant 0 : index
    %34 = vector.load %arg5[%c0_15, %c0_16, %c0_17, %c0_18] : memref<1x1x8x2xf32, #tpu.memory_space<vmem>>, vector<1x1x8x2xf32>
    %35 = vector.shape_cast %34 : vector<1x1x8x2xf32> to vector<8x2xf32>
    %36 = vector.shape_cast %33 : vector<8x2xf32> to vector<1x1x8x2xf32>
    tpu.vector_store %arg5[%c0_15, %c0_16, %c0_17, %c0_18], %36 {strides = array<i32>} : memref<1x1x8x2xf32, #tpu.memory_space<vmem>>, vector<1x1x8x2xf32>,
    return
  }
  func.func @transform_0(%arg0: i32, %arg1: i32) -> (i32, i32, i32, i32) {
    %c0_i32 = arith.constant 0 : i32
    %c0_i32_0 = arith.constant 0 : i32
    %c0_i32_1 = arith.constant 0 : i32
    return %arg0, %c0_i32, %c0_i32_0, %arg1 : i32, i32, i32, i32
  }
  func.func @transform_1(%arg0: i32, %arg1: i32) -> (i32, i32, i32, i32) {
    %c1_i32 = arith.constant 1 : i32
    %0 = arith.addi %arg1, %c1_i32 : i32
    %c1_i32_0 = arith.constant 1 : i32
    %1 = arith.muli %0, %c1_i32_0 : i32
    %c0_i32 = arith.constant 0 : i32
    %c0_i32_1 = arith.constant 0 : i32
    %c0_i32_2 = arith.constant 0 : i32
    return %arg0, %c0_i32, %c0_i32_1, %1 : i32, i32, i32, i32
  }
  func.func @transform_2(%arg0: i32, %arg1: i32) -> (i32, i32) {
    %c0_i32 = arith.constant 0 : i32
    %c0_i32_0 = arith.constant 0 : i32
    %c0_i32_1 = arith.constant 0 : i32
    return %c0_i32, %c0_i32_0 : i32, i32
  }
  func.func @transform_3(%arg0: i32, %arg1: i32) -> (i32, i32, i32, i32) {
    %c0_i32 = arith.constant 0 : i32
    %c0_i32_0 = arith.constant 0 : i32
    %c0_i32_1 = arith.constant 0 : i32
    return %arg0, %arg1, %c0_i32, %c0_i32_0 : i32, i32, i32, i32
  }
}

</mosaic_0001>

<llo_original>
// kernel: tpu_custom_call.1
$region0: #{tpu_custom_call.1}
  #allocation0 [shape = 'u32[]', space=smem, size = 0x4, offset = 0x4, fixed_abs, tag = 'smem constant byte address 0x4 - core index']
  #allocation1 [shape = 'u32[144,128]{1,0:T(1,128)}', space=vmem, size = 0x12000, scoped, tag = 'internal scratch']
  %s0 = inlined_call_operand.hbm [shape: f32[2,1,8,256], index: 0, kind: input, shape index: {}]
  %s1 = inlined_call_operand.hbm [shape: f32[2,1,8,256], index: 1, kind: input, shape index: {}]
  %s2 = inlined_call_operand.hbm [shape: f32[8,24], index: 2, kind: input, shape index: {}]
  %s3 = inlined_call_operand.vmem [shape: f32[2,1,8,2], index: 3, kind: output, shape index: {}]
  %s4 = sld [smem:[#allocation0]]
  $region57: #{tpu_custom_call.1} parent=0
    _
  %s6 = ssub.s32 1, %s4
  %s7 = scalar_select 0, %s6, %s4
  $region1: #{tpu_custom_call.1} parent=0
    #allocation2 [shape = 'u8[8192]{0}', space=vmem, size = 0x2000, scoped, tag = 'input window, operand 0']
    #allocation3 [shape = 's32[2]{0}', space=sflag, size = 0x8, scoped, tag = 'scoped memory for tpu_custom_call.1']
    #allocation4 [shape = 'u8[8192]{0}', space=vmem, size = 0x2000, scoped, tag = 'input window, operand 1']
    #allocation5 [shape = 's32[2]{0}', space=sflag, size = 0x8, scoped, tag = 'scoped memory for tpu_custom_call.1']
    #allocation6 [shape = 'u8[4096]{0}', space=vmem, size = 0x1000, scoped, tag = 'input window, operand 2, single buffered']
    %8 = vsyncpa [#allocation3], 0
    %s9 = scalar_lea.sflag [#allocation3], 1
    %10 = vsyncpa %s9, 0
    %11 = vsyncpa [#allocation5], 0
    %s12 = scalar_lea.sflag [#allocation5], 1
    %13 = vsyncpa %s12, 0
    loop: start=0, step=1, limit=4
    $region2: #{tpu_custom_call.1} parent=1 // loop_pre_header
      _
    $region3: #{tpu_custom_call.1} parent=1 // loop_header
      %s15 = sphi 0, %s19
      %p16 = scmp.ge.s32.totalorder %s15, 4
      %s22 = sphi 0, %s34
      %s23 = sphi 0, %s30
      %s24 = sphi 0, %s22
      %s25 = sphi 0, %s23
      %s26 = sphi 0, %s24
      %s27 = sphi 0, %s25
      %s39 = sphi 0, %s41
      %s42 = sphi 0, %s39
      %s43 = sphi 0, %s42
      %s59 = sphi 0, %s43
      %s69 = sphi 0, %s71
      %s72 = sphi 0, %s69
      %s73 = sphi 0, %s72
      %s89 = sphi 0, %s73
      %s93 = sphi 0, %s93
      %s95 = sphi 0, %s93
      %s96 = sphi 0, %s95
      %s110 = sphi 0, %s96
      %s118 = sphi 0, %s120
      %s121 = sphi 0, %s118
      %s122 = sphi 0, %s121
      %s138 = sphi 0, %s122
    $region4: #{tpu_custom_call.1} parent=1 // loop_header_branch
      %18 = sbr.rel (%p16) target = $region8
    $region5: #{tpu_custom_call.1} parent=1 // loop_body
      %s20 = ssub.s32 %s15, 1
      %s21 = ssub.s32 %s15, 2
      %s28 = sadd.s32 1, %s23
      %p29 = scmp.ge.s32.totalorder %s28, 1
      %s30 = scalar_select %p29, 0, %s28
      %s31 = sadd.s32 1, %s22
      %s32 = scalar_select %p29, %s31, %s22
      %p33 = scmp.ge.s32.totalorder %s32, 2
      %s34 = scalar_select %p33, 0, %s32
      %s35 = ssub.s32 %s22, %s34
      %s36 = ssub.s32 %s23, %s30
      %s37 = sor.u32 %s35, %s36
      %p38 = scmp.eq.s32.totalorder %s37, 0
      %s40 = sadd.s32 %s39, 1
      %s41 = scalar_select %p38, %s39, %s40
      %p44 = pneg %p38
      %p45 = scmp.eq.s32.totalorder %s15, 1
      %p46 = por %p44, %p45
      %p47 = scmp.ne.s32.totalorder %s39, %s42
      %p48 = scmp.eq.s32.totalorder %s15, 0
      %p49 = por %p47, %p48
      %p50 = scmp.ne.s32.totalorder %s39, %s42
      %p51 = scmp.eq.s32.totalorder %s20, 1
      %p52 = por %p50, %p51
      %p53 = scmp.ne.s32.totalorder %s42, %s43
      %p54 = scmp.eq.s32.totalorder %s20, 0
      %p55 = por %p53, %p54
      %p56 = scmp.ne.s32.totalorder %s42, %s43
      %p57 = scmp.eq.s32.totalorder %s21, 1
      %p58 = por %p56, %p57
      %p60 = scmp.ne.s32.totalorder %s43, %s59
      %p61 = scmp.eq.s32.totalorder %s21, 0
      %p62 = por %p60, %p61
      %s63 = sadd.s32 %s23, 1
      %s64 = sadd.s32 %s30, 1
      %s65 = ssub.s32 %s22, %s34
      %s66 = ssub.s32 %s63, %s64
      %s67 = sor.u32 %s65, %s66
      %p68 = scmp.eq.s32.totalorder %s67, 0
      %s70 = sadd.s32 %s69, 1
      %s71 = scalar_select %p68, %s69, %s70
      %p74 = pneg %p68
      %p75 = scmp.eq.s32.totalorder %s15, 1
      %p76 = por %p74, %p75
      %p77 = scmp.ne.s32.totalorder %s69, %s72
      %p78 = scmp.eq.s32.totalorder %s15, 0
      %p79 = por %p77, %p78
      %p80 = scmp.ne.s32.totalorder %s69, %s72
      %p81 = scmp.eq.s32.totalorder %s20, 1
      %p82 = por %p80, %p81
      %p83 = scmp.ne.s32.totalorder %s72, %s73
      %p84 = scmp.eq.s32.totalorder %s20, 0
      %p85 = por %p83, %p84
      %p86 = scmp.ne.s32.totalorder %s72, %s73
      %p87 = scmp.eq.s32.totalorder %s21, 1
      %p88 = por %p86, %p87
      %p90 = scmp.ne.s32.totalorder %s73, %s89
      %p91 = scmp.eq.s32.totalorder %s21, 0
      %p92 = por %p90, %p91
      %s94 = sadd.s32 %s93, 1
      %p97 = scmp.eq.s32.totalorder %s15, 1
      %p98 = scmp.ne.s32.totalorder %s93, %s95
      %p99 = scmp.eq.s32.totalorder %s15, 0
      %p100 = por %p98, %p99
      %p101 = scmp.ne.s32.totalorder %s93, %s95
      %p102 = scmp.eq.s32.totalorder %s20, 1
      %p103 = por %p101, %p102
      %p104 = scmp.ne.s32.totalorder %s95, %s96
      %p105 = scmp.eq.s32.totalorder %s20, 0
      %p106 = por %p104, %p105
      %p107 = scmp.ne.s32.totalorder %s95, %s96
      %p108 = scmp.eq.s32.totalorder %s21, 1
      %p109 = por %p107, %p108
      %p111 = scmp.ne.s32.totalorder %s96, %s110
      %p112 = scmp.eq.s32.totalorder %s21, 0
      %p113 = por %p111, %p112
      %s114 = ssub.s32 %s22, %s34
      %s115 = ssub.s32 %s23, %s30
      %s116 = sor.u32 %s114, %s115
      %p117 = scmp.eq.s32.totalorder %s116, 0
      %s119 = sadd.s32 %s118, 1
      %s120 = scalar_select %p117, %s118, %s119
      %p123 = pneg %p117
      %p124 = scmp.eq.s32.totalorder %s15, 1
      %p125 = por %p123, %p124
      %p126 = scmp.ne.s32.totalorder %s118, %s121
      %p127 = scmp.eq.s32.totalorder %s15, 0
      %p128 = por %p126, %p127
      %p129 = scmp.ne.s32.totalorder %s118, %s121
      %p130 = scmp.eq.s32.totalorder %s20, 1
      %p131 = por %p129, %p130
      %p132 = scmp.ne.s32.totalorder %s121, %s122
      %p133 = scmp.eq.s32.totalorder %s20, 0
      %p134 = por %p132, %p133
      %p135 = scmp.ne.s32.totalorder %s121, %s122
      %p136 = scmp.eq.s32.totalorder %s21, 1
      %p137 = por %p135, %p136
      %p139 = scmp.ne.s32.totalorder %s122, %s138
      %p140 = scmp.eq.s32.totalorder %s21, 0
      %p141 = por %p139, %p140
      %p142 = scmp.le.s32.totalorder 1, %s15
      %p143 = scmp.lt.s32.totalorder %s15, 3
      %p144 = pnand %p142, %p143
      %p145 = pneg %p144
      // Predicated region
      $region9: #{tpu_custom_call.1} parent=5 // pred_check
        _
      $region10: #{tpu_custom_call.1} parent=5 // pred_check_branch
        %147 = sbr.rel (%p144) target = $region12
      $region11: #{tpu_custom_call.1} parent=5 // pred_region
        %s148 = ssub.s32 %s15, 1
        // Predicated region
        $region13: #{tpu_custom_call.1} parent=11 // pred_check
          %p149 = pneg %p106
        $region14: #{tpu_custom_call.1} parent=11 // pred_check_branch
          %151 = sbr.rel (%p149) target = $region16
        $region15: #{tpu_custom_call.1} parent=11 // pred_region
          %s153 = ssub.s32 128, 128
          %154 = vsyncadd [#allocation5], %s153
          %s156 = sshll.u32 [#allocation6], 4
          %s157 = int_to_ptr.vmem [resolvable:$true] %s156
          %159 = dma.hbm_to_vmem [thread:$0]  %s2, 128, %s157, [#allocation5]
        $region16: #{tpu_custom_call.1} parent=11 // pred_fallthru
          _
      $region12: #{tpu_custom_call.1} parent=5 // pred_fallthru
        _
      %p160 = scmp.lt.s32.totalorder %s15, 2
      // Predicated region
      $region17: #{tpu_custom_call.1} parent=5 // pred_check
        %p161 = pneg %p160
      $region18: #{tpu_custom_call.1} parent=5 // pred_check_branch
        %163 = sbr.rel (%p161) target = $region20
      $region19: #{tpu_custom_call.1} parent=5 // pred_region
        // Predicated region
        $region21: #{tpu_custom_call.1} parent=19 // pred_check
          %p164 = pneg %p49
        $region22: #{tpu_custom_call.1} parent=19 // pred_check_branch
          %166 = sbr.rel (%p164) target = $region24
        $region23: #{tpu_custom_call.1} parent=19 // pred_region
          %s167 = sand.u32 %s39, 1
          %s168 = scalar_lea.sflag [#allocation3], %s167
          %s169 = sand.u32 %s39, 1
          %s170 = smul.addr %s169, 8
          %s171 = scalar_lea.vmem [#allocation2], %s170
          %s173 = ssub.s32 128, 128
          %174 = vsyncadd %s168, %s173
          %s175 = smul.addr %s22, 2
          %s176 = sadd.s32 %s23, %s175
          %s177 = smul.addr %s176, 128
          %s178 = scalar_lea.hbm %s0, %s177
          %s180 = sshll.u32 %s171, 4
          %s181 = int_to_ptr.vmem [resolvable:$true] %s180
          %183 = dma.hbm_to_vmem [thread:$0]  %s178, 128, %s181, %s168
        $region24: #{tpu_custom_call.1} parent=19 // pred_fallthru
          _
        // Predicated region
        $region25: #{tpu_custom_call.1} parent=19 // pred_check
          %p184 = pneg %p79
        $region26: #{tpu_custom_call.1} parent=19 // pred_check_branch
          %186 = sbr.rel (%p184) target = $region28
        $region27: #{tpu_custom_call.1} parent=19 // pred_region
          %s187 = sand.u32 %s15, 1
          %s188 = scalar_lea.sflag [#allocation5], %s187
          %s189 = sand.u32 %s69, 1
          %s190 = smul.addr %s189, 8
          %s191 = scalar_lea.vmem [#allocation4], %s190
          %s192 = sadd.s32 %s23, 1
          %s194 = ssub.s32 128, 128
          %195 = vsyncadd %s188, %s194
          %s196 = smul.addr %s22, 2
          %s197 = sadd.s32 %s192, %s196
          %s198 = smul.addr %s197, 128
          %s199 = scalar_lea.hbm %s1, %s198
          %s201 = sshll.u32 %s191, 4
          %s202 = int_to_ptr.vmem [resolvable:$true] %s201
          %204 = dma.hbm_to_vmem [thread:$0]  %s199, 128, %s202, %s188
        $region28: #{tpu_custom_call.1} parent=19 // pred_fallthru
          _
      $region20: #{tpu_custom_call.1} parent=5 // pred_fallthru
        _
      %p205 = scmp.le.s32.totalorder 1, %s15
      %p206 = scmp.lt.s32.totalorder %s15, 3
      %p207 = pnand %p205, %p206
      %p208 = pneg %p207
      // Predicated region
      $region29: #{tpu_custom_call.1} parent=5 // pred_check
        _
      $region30: #{tpu_custom_call.1} parent=5 // pred_check_branch
        %210 = sbr.rel (%p207) target = $region32
      $region31: #{tpu_custom_call.1} parent=5 // pred_region
        %s211 = ssub.s32 %s15, 1
        %s212 = sand.u32 %s42, 1
        %s213 = scalar_lea.sflag [#allocation3], %s212
        %s214 = sand.u32 %s42, 1
        %s215 = smul.addr %s214, 8
        %s216 = scalar_lea.vmem [#allocation2], %s215
        // Predicated region
        $region33: #{tpu_custom_call.1} parent=31 // pred_check
          %p217 = pneg %p55
        $region34: #{tpu_custom_call.1} parent=31 // pred_check_branch
          %219 = sbr.rel (%p217) target = $region36
        $region35: #{tpu_custom_call.1} parent=31 // pred_region
          %220 = dma.done %s213, 128
        $region36: #{tpu_custom_call.1} parent=31 // pred_fallthru
          _
        %s221 = sand.u32 %s20, 1
        %s222 = scalar_lea.sflag [#allocation5], %s221
        %s223 = sand.u32 %s72, 1
        %s224 = smul.addr %s223, 8
        %s225 = scalar_lea.vmem [#allocation4], %s224
        // Predicated region
        $region37: #{tpu_custom_call.1} parent=31 // pred_check
          %p226 = pneg %p85
        $region38: #{tpu_custom_call.1} parent=31 // pred_check_branch
          %228 = sbr.rel (%p226) target = $region40
        $region39: #{tpu_custom_call.1} parent=31 // pred_region
          %229 = dma.done %s222, 128
        $region40: #{tpu_custom_call.1} parent=31 // pred_fallthru
          _
        // Predicated region
        $region41: #{tpu_custom_call.1} parent=31 // pred_check
          %p230 = pneg %p106
        $region42: #{tpu_custom_call.1} parent=31 // pred_check_branch
          %232 = sbr.rel (%p230) target = $region44
        $region43: #{tpu_custom_call.1} parent=31 // pred_region
          %233 = dma.done [#allocation5], 128
        $region44: #{tpu_custom_call.1} parent=31 // pred_fallthru
          _
        %s234 = sand.u32 %s42, 1
        %s235 = scalar_lea.sflag [#allocation3], %s234
        %s236 = sand.u32 %s42, 1
        %s237 = smul.addr %s236, 8
        %s238 = scalar_lea.vmem [#allocation2], %s237
        %p239 = pneg %p55
        %p240 = pneg %p52
        %s241 = sand.u32 %s20, 1
        %s242 = scalar_lea.sflag [#allocation5], %s241
        %s243 = sand.u32 %s72, 1
        %s244 = smul.addr %s243, 8
        %s245 = scalar_lea.vmem [#allocation4], %s244
        %p246 = pneg %p85
        %p247 = pneg %p82
        %p248 = pneg %p106
        %p249 = pneg %p103
        %p250 = pneg %p134
        %p251 = pneg %p131
        %p252 = scmp.lt.s32.totalorder %s24, 1
        %s253 = scalar_select %p252, %s24, 1
        %p254 = scmp.lt.s32.totalorder %s25, 0
        %s255 = scalar_select %p254, %s25, 0
        %s256 = sadd.s32 %s255, %s253
        %s257 = smul.addr %s256, 8
        %s258 = scalar_lea.vmem %s3, %s257
        %s259 = sadd.s32 %s25, 1
        %p260 = scmp.lt.s32.totalorder %s24, 1
        %s261 = scalar_select %p260, %s24, 1
        %p262 = scmp.lt.s32.totalorder %s25, 0
        %s263 = scalar_select %p262, %s25, 0
        %s264 = sadd.s32 %s263, %s261
        %s265 = smul.addr %s264, 8
        %s266 = scalar_lea.vmem %s3, %s265
        %v267 = vld [vmem:[%s216] sm:$0xff]
        %v268 = vld [vmem:[%s225] sm:$0xff]
        %271 = vrot.lane.b32.xlu0 %v267, 127
        %v272 = vpop.permute.xlu0 %271
        %273 = vrot.lane.b32.xlu0 %v268, 127
        %v274 = vpop.permute.xlu0 %273
        %vm275 = vcmask 1039360
        %v276 = vsel %vm275, %v272, %v274
        %278 = vrot.lane.b32.xlu0 %v267, 126
        %v279 = vpop.permute.xlu0 %278
        %280 = vrot.lane.b32.xlu0 %v268, 126
        %v281 = vpop.permute.xlu0 %280
        %vm282 = vcmask 1031168
        %v283 = vsel %vm282, %v279, %v281
        %v285 = vld [vmem:[#allocation6] sm:$0xff]
        %vm286 = vcmask 195584
        %v288 = vsel %vm286, %v285, 0
        %290 = vmatprep.subr.mxu0 0.0
        %291 = vmatpush1.msra.mxu0 %v267
        %292 = vmatprep.subr.mxu0 0.0
        %293 = vmatpush1.msra.mxu0 %v276
        %294 = vmatprep.subr.mxu0 0.0
        %295 = vmatpush1.msra.mxu0 %v283
        %296 = vmatprep.subr.mxu0 0.0
        %297 = vmatpush1.msra.mxu0 0.0
        %298 = vmatprep.subr.mxu0 0.0
        %299 = vmatpush1.msra.mxu0 0.0
        %300 = vmatprep.subr.mxu0 0.0
        %301 = vmatpush1.msra.mxu0 0.0
        %302 = vmatprep.subr.mxu0 0.0
        %303 = vmatpush1.msra.mxu0 0.0
        %304 = vmatprep.subr.mxu0 0.0
        %305 = vmatpush1.msra.mxu0 0.0
        %306 = vmatprep.subr.mxu0 0.0
        %307 = vmatpush1.msra.mxu0 0.0
        %308 = vmatprep.subr.mxu0 0.0
        %309 = vmatpush1.msra.mxu0 0.0
        %310 = vmatprep.subr.mxu0 0.0
        %311 = vmatpush1.msra.mxu0 0.0
        %312 = vmatprep.subr.mxu0 0.0
        %313 = vmatpush1.msra.mxu0 0.0
        %314 = vmatprep.subr.mxu0 0.0
        %315 = vmatpush1.msra.mxu0 0.0
        %316 = vmatprep.subr.mxu0 0.0
        %317 = vmatpush1.msra.mxu0 0.0
        %318 = vmatprep.subr.mxu0 0.0
        %319 = vmatpush1.msra.mxu0 0.0
        %320 = vmatprep.subr.mxu0 0.0
        %321 = vmatpush1.msra.mxu0 0.0
        %322 = vmatprep.subr.mxu0 0.0
        %323 = vmatpush1.msra.mxu0 0.0
        %324 = vmatprep.subr.mxu0 0.0
        %325 = vmatpush1.msra.mxu0 0.0
        %326 = vmatprep.subr.mxu0 0.0
        %327 = vmatpush1.msra.mxu0 0.0
        %328 = vmatprep.subr.mxu0 0.0
        %329 = vmatpush1.msra.mxu0 0.0
        %330 = vmatprep.subr.mxu0 0.0
        %331 = vmatpush1.msra.mxu0 0.0
        %332 = vmatprep.subr.mxu0 0.0
        %333 = vmatpush1.msra.mxu0 0.0
        %334 = vmatprep.subr.mxu0 0.0
        %335 = vmatpush1.msra.mxu0 0.0
        %336 = vmatprep.subr.mxu0 0.0
        %337 = vmatpush1.msra.mxu0 0.0
        %338 = vmatprep.subr.mxu0 0.0
        %339 = vmatpush1.msra.mxu0 0.0
        %340 = vmatprep.subr.mxu0 0.0
        %341 = vmatpush1.msra.mxu0 0.0
        %342 = vmatprep.subr.mxu0 0.0
        %343 = vmatpush1.msra.mxu0 0.0
        %344 = vmatprep.subr.mxu0 0.0
        %345 = vmatpush1.msra.mxu0 0.0
        %346 = vmatprep.subr.mxu0 0.0
        %347 = vmatpush1.msra.mxu0 0.0
        %348 = vmatprep.subr.mxu0 0.0
        %349 = vmatpush1.msra.mxu0 0.0
        %350 = vmatprep.subr.mxu0 0.0
        %351 = vmatpush1.msra.mxu0 0.0
        %352 = vmatprep.subr.mxu0 0.0
        %353 = vmatpush1.msra.mxu0 0.0
        %354 = vmatprep.mubr.f32.mxu0 0.0
        %355 = vmatmul.mubr.f32.gmra.mrb[0].mxu0 %v288
        %v356 = vpop.f32.mrb[0].mxu0
        %v357 = vadd.f32 0.0, %v356
        %v358 = vpop.f32.mrb[0].mxu0
        %359 = vdwg.mxu0
        %v360 = vmax.f32 %v357, 0.0
        %s361 = smul.u32 %s25, 128
        %s362 = ssub.s32 16, %s361
        %p363 = scmp.lt.s32.totalorder %s362, 128
        %s364 = scalar_select %p363, %s362, 128
        %v365 = vlaneseq
        %v366 = vand.u32 %v365, 127
        %v367 = vstv %s364
        %vm368 = vcmp.lt.s32.totalorder %v366, %v367
        %s369 = scvt.s32.f32 %s364
        %v370 = vsel %vm368, %v360, 0.0
        %371 = vadd.xlane.f32.xlu0 %v370
        %v372 = vpop.xlane.xlu0 %371
        %v373 = vstv %s369
        %v374 = vrcp.pop %v373
        %v375 = vmul.f32 %v372, %v374
        %v376 = vsub.f32 %v360, %v375
        %v377 = vmul.f32 %v376, %v376
        %v378 = vsel %vm368, %v377, 0.0
        %379 = vadd.xlane.f32.xlu0 %v378
        %v380 = vpop.xlane.xlu0 %379
        %vm381 = vcmask 7168
        %v382 = vsel %vm381, %v372, %v380
        %vm383 = vcmask 15360
        %384 = vst.msk [vmem:[%s266] sm:$0xff] %vm383, %v382
        %p385 = scmp.lt.s32.totalorder %s24, 1
        %s386 = scalar_select %p385, %s24, 1
        %p387 = scmp.lt.s32.totalorder %s25, 0
        %s388 = scalar_select %p387, %s25, 0
        %s389 = sadd.s32 %s388, %s386
        %s390 = smul.addr %s389, 8
        %s391 = scalar_lea.vmem %s3, %s390
        // Predicated region
        $region45: #{tpu_custom_call.1} parent=31 // pred_check
          %p392 = pneg %p131
        $region46: #{tpu_custom_call.1} parent=31 // pred_check_branch
          %394 = sbr.rel (%p392) target = $region48
        $region47: #{tpu_custom_call.1} parent=31 // pred_region
          _
        $region48: #{tpu_custom_call.1} parent=31 // pred_fallthru
          _
      $region32: #{tpu_custom_call.1} parent=5 // pred_fallthru
        _
      %p395 = scmp.le.s32.totalorder 2, %s15
      // Predicated region
      $region49: #{tpu_custom_call.1} parent=5 // pred_check
        %p396 = pneg %p395
      $region50: #{tpu_custom_call.1} parent=5 // pred_check_branch
        %398 = sbr.rel (%p396) target = $region52
      $region51: #{tpu_custom_call.1} parent=5 // pred_region
        %s399 = ssub.s32 %s15, 2
        // Predicated region
        $region53: #{tpu_custom_call.1} parent=51 // pred_check
          %p400 = pneg %p137
        $region54: #{tpu_custom_call.1} parent=51 // pred_check_branch
          %402 = sbr.rel (%p400) target = $region56
        $region55: #{tpu_custom_call.1} parent=51 // pred_region
          %p403 = scmp.lt.s32.totalorder %s26, 1
          %s404 = scalar_select %p403, %s26, 1
          %p405 = scmp.lt.s32.totalorder %s27, 0
          %s406 = scalar_select %p405, %s27, 0
          %s407 = sadd.s32 %s406, %s404
          %s408 = smul.addr %s407, 8
          %s409 = scalar_lea.vmem %s3, %s408
        $region56: #{tpu_custom_call.1} parent=51 // pred_fallthru
          _
      $region52: #{tpu_custom_call.1} parent=5 // pred_fallthru
        _
    $region6: #{tpu_custom_call.1} parent=1 // loop_footer
      %s19 = sadd.s32 1, %s15
    $region7: #{tpu_custom_call.1} parent=1 // loop_footer_branch
      %14 = sbr.rel target = $region3
    $region8: #{tpu_custom_call.1} parent=1 // loop_exit
      _
    %410 = vsyncpa [#allocation3], 1
    %s411 = scalar_lea.sflag [#allocation3], 1
    %412 = vsyncpa %s411, 1
    %413 = vsyncpa [#allocation5], 1
    %s414 = scalar_lea.sflag [#allocation5], 1
    %415 = vsyncpa %s414, 1

</llo_original>
